<compile_context>
chip_gen: v7x
topology: tpu7x:2x2x1
jax: 0.10.0
libtpu: 0.0.40
codegen_flags: <defaults>
</compile_context>

<pallas_src>
import jax
import jax.numpy as jnp
from jax import lax
from jax.experimental import pallas as pl
from jax.experimental.pallas import tpu as pltpu


def _round_up(n: int, m: int) -> int:
    return (n + m - 1) // m * m


def _head_kernel(x_ref, w_ref, b_ref, o_ref):
    """x_ref: (tb, D)  w_ref: (8, D) (row 0 = collapsed weights, rows 1..7 zero)
       b_ref: (1, 1)   o_ref: (1, tb)  -- batch on lanes -> lane-dense store."""
    # (8, D) @ (tb, D)^T -> (8, tb): contract over the feature axis (trans_b
    # matmul, same dimension_numbers pattern as q @ k^T in flash attention).
    h = lax.dot_general(
        w_ref[...], x_ref[...],
        dimension_numbers=(((1,), (1,)), ((), ())),
        preferred_element_type=jnp.float32,
    )
    o_ref[...] = jax.nn.sigmoid(h[0:1, :] + b_ref[...]).astype(o_ref.dtype)


def collapse_params(params):
    """Fold the 4 Linear layers (PyTorch (out,in) layout) into a single affine
    map.  Do this ONCE at model-load time (~200 flops), not per forward call."""
    w1, b1 = params["w1"], params["b1"]   # (6, D), (6,)
    w2, b2 = params["w2"], params["b2"]   # (4, 6), (4,)
    w3, b3 = params["w3"], params["b3"]   # (2, 4), (2,)
    w4, b4 = params["w4"], params["b4"]   # (1, 2), (1,)
    w_row = (w4 @ w3 @ w2 @ w1).astype(jnp.float32)                  # (1, D)
    b = (w4 @ (w3 @ (w2 @ b1 + b2) + b3) + b4).astype(jnp.float32)   # (1,)
    # Pad the single weight row to 8 sublanes (rows 1..7 zero) so the MXU
    # operand is (8,128)-tile friendly; only row 0 of the result is used.
    w_pad = jnp.zeros((8, w_row.shape[1]), jnp.float32).at[0:1, :].set(w_row)
    return w_pad, b.reshape(1, 1)


def final_classifier_forward(x, w_pad, b_comb, *, batch_tile=1024):
    """x: (B, D) float32.  w_pad, b_comb: outputs of collapse_params."""
    B, D = x.shape
    bt = max(128, _round_up(int(batch_tile), 128))   # keep output tiles lane-dense
    tb = min(bt, _round_up(B, 128))
    grid = (pl.cdiv(B, tb),)
    vmem = pltpu.MemorySpace.VMEM

    out = pl.pallas_call(
        _head_kernel,
        out_shape=jax.ShapeDtypeStruct((1, B), jnp.float32),
        grid=grid,
        in_specs=[
            pl.BlockSpec((tb, D), lambda i: (i, 0), memory_space=vmem),  # x tiles
            pl.BlockSpec((8, D), lambda i: (0, 0), memory_space=vmem),   # weights
            pl.BlockSpec((1, 1), lambda i: (0, 0), memory_space=vmem),   # bias
        ],
        out_specs=pl.BlockSpec((1, tb), lambda i: (0, i), memory_space=vmem),
        compiler_params=pltpu.CompilerParams(
            dimension_semantics=("parallel",)),   # shard batch tiles across TCs (v7x)
    )(x, w_pad, b_comb)
    return out.reshape(B, 1)


def init_params(key, dim):
    """Deterministic synthetic params with the same shapes as the PyTorch module
    (torch.nn.Linear stores weight as (out_features, in_features))."""
    ks = jax.random.split(key, 8)

    def lin(kw, kb, in_f, out_f):
        bound = 1.0 / jnp.sqrt(jnp.float32(in_f))
        w = jax.random.uniform(kw, (out_f, in_f), jnp.float32, -bound, bound)
        b = jax.random.uniform(kb, (out_f,), jnp.float32, -bound, bound)
        return w, b

    w1, b1 = lin(ks[0], ks[1], dim, 6)
    w2, b2 = lin(ks[2], ks[3], 6, 4)
    w3, b3 = lin(ks[4], ks[5], 4, 2)
    w4, b4 = lin(ks[6], ks[7], 2, 1)
    return {"w1": w1, "b1": b1, "w2": w2, "b2": b2,
            "w3": w3, "b3": b3, "w4": w4, "b4": b4}


def reference_forward(x, p):
    # Layer-by-layer reference matching the PyTorch forward exactly
    # (finallClass has no activation between the Linear layers).
    h = x @ p["w1"].T + p["b1"]
    h = h @ p["w2"].T + p["b2"]
    h = h @ p["w3"].T + p["b3"]
    return jax.nn.sigmoid(h @ p["w4"].T + p["b4"])


if __name__ == "__main__":
    key = jax.random.PRNGKey(0)
    k_param, k_x = jax.random.split(key)

    dim = 32    # Linear(dim, 6) input width
    B = 256     # small demo batch; batch_tile=128 -> 2 grid steps (both TCs on v7x)
    params = init_params(k_param, dim)
    x = jax.random.normal(k_x, (B, dim), jnp.float32)

    w_pad, b_comb = collapse_params(params)          # one-time weight folding
    out = final_classifier_forward(x, w_pad, b_comb, batch_tile=128)
    out = jax.block_until_ready(out)

    ref = reference_forward(x, params)
    assert out.shape == (B, 1), out.shape
    assert jnp.allclose(out, ref, atol=2e-5, rtol=2e-5), (
        float(jnp.max(jnp.abs(out - ref))))

    print("KERNEL_OK")
</pallas_src>

<mosaic_0001>
module attributes {stable_mosaic.version = 11 : i64} {
  func.func @_head_kernel(%arg0: i32, %arg1: memref<128x32xf32, #tpu.memory_space<vmem>>, %arg2: memref<8x32xf32, #tpu.memory_space<vmem>>, %arg3: memref<1x1xf32, #tpu.memory_space<vmem>>, %arg4: memref<1x128xf32, #tpu.memory_space<vmem>>) attributes {dimension_semantics = [#tpu.dimension_semantics<parallel>], iteration_bounds = array<i64: 2>, scalar_prefetch = 0 : i64, scratch_operands = 0 : i64, tpu.core_type = #tpu.core_type<tc>, window_params = [{transform_indices = @transform_0, window_bounds = array<i64: 128, 32>}, {pipeline_mode = #tpu.pipeline_mode<synchronous>, transform_indices = @transform_1, window_bounds = array<i64: 8, 32>}, {pipeline_mode = #tpu.pipeline_mode<synchronous>, transform_indices = @transform_2, window_bounds = array<i64: 1, 1>}, {transform_indices = @transform_3, window_bounds = array<i64: 1, 128>}]} {
    %c0 = arith.constant 0 : index
    %c0_0 = arith.constant 0 : index
    %0 = vector.load %arg2[%c0, %c0_0] : memref<8x32xf32, #tpu.memory_space<vmem>>, vector<8x32xf32>
    %c0_1 = arith.constant 0 : index
    %c0_2 = arith.constant 0 : index
    %1 = vector.load %arg1[%c0_1, %c0_2] : memref<128x32xf32, #tpu.memory_space<vmem>>, vector<128x32xf32>
    %cst = arith.constant dense<0.000000e+00> : vector<8x128xf32>
    %2 = tpu.matmul %0, %1, %cst {dimension_numbers = #tpu.dot_dimension_numbers<[1], [1], [0], [0], [0, 0, 1, 0], [], []>} : vector<8x32xf32>, vector<128x32xf32>, vector<8x128xf32> -> vector<8x128xf32>
    %3 = vector.extract_strided_slice %2 {offsets = [0, 0], sizes = [1, 128], strides = [1, 1]} : vector<8x128xf32> to vector<1x128xf32>
    %c0_3 = arith.constant 0 : index
    %c0_4 = arith.constant 0 : index
    %4 = vector.load %arg3[%c0_3, %c0_4] : memref<1x1xf32, #tpu.memory_space<vmem>>, vector<1x1xf32>
    %5 = vector.broadcast %4 : vector<1x1xf32> to vector<1x128xf32>
    %6 = arith.addf %3, %5 : vector<1x128xf32>
    %7 = arith.negf %6 : vector<1x128xf32>
    %8 = math.exp %7 : vector<1x128xf32>
    %cst_5 = arith.constant 1.000000e+00 : f32
    %9 = vector.broadcast %cst_5 : f32 to vector<1x128xf32>
    %10 = arith.addf %9, %8 : vector<1x128xf32>
    %11 = arith.divf %9, %10 : vector<1x128xf32>
    %c0_6 = arith.constant 0 : index
    %c0_7 = arith.constant 0 : index
    %12 = vector.load %arg4[%c0_6, %c0_7] : memref<1x128xf32, #tpu.memory_space<vmem>>, vector<1x128xf32>
    tpu.vector_store %arg4[%c0_6, %c0_7], %11 {strides = array<i32>} : memref<1x128xf32, #tpu.memory_space<vmem>>, vector<1x128xf32>,
    return
  }
  func.func @transform_0(%arg0: i32) -> (i32, i32) {
    %c0_i32 = arith.constant 0 : i32
    %c0_i32_0 = arith.constant 0 : i32
    return %arg0, %c0_i32 : i32, i32
  }
  func.func @transform_1(%arg0: i32) -> (i32, i32) {
    %c0_i32 = arith.constant 0 : i32
    %c0_i32_0 = arith.constant 0 : i32
    %c0_i32_1 = arith.constant 0 : i32
    return %c0_i32, %c0_i32_0 : i32, i32
  }
  func.func @transform_2(%arg0: i32) -> (i32, i32) {
    %c0_i32 = arith.constant 0 : i32
    %c0_i32_0 = arith.constant 0 : i32
    %c0_i32_1 = arith.constant 0 : i32
    return %c0_i32, %c0_i32_0 : i32, i32
  }
  func.func @transform_3(%arg0: i32) -> (i32, i32) {
    %c0_i32 = arith.constant 0 : i32
    %c0_i32_0 = arith.constant 0 : i32
    return %c0_i32, %arg0 : i32, i32
  }
}

</mosaic_0001>

<llo_original>
// kernel: tpu_custom_call.1
$region0: #{tpu_custom_call.1}
  #allocation0 [shape = 'u32[]', space=smem, size = 0x4, offset = 0x4, fixed_abs, tag = 'smem constant byte address 0x4 - core index']
  #allocation1 [shape = 'u32[144,128]{1,0:T(1,128)}', space=vmem, size = 0x12000, scoped, tag = 'internal scratch']
  #allocation2 [shape = 'f32[1,1]{1,0:T(1,128)S(1)}', space=vmem, size = 0x200, scoped, tag = 'scoped memory for tpu_custom_call.1']
  %s0 = inlined_call_operand.vmem [shape: f32[256,32], index: 0, kind: input, shape index: {}]
  %s1 = inlined_call_operand.vmem [shape: f32[8,32], index: 1, kind: input, shape index: {}]
  %s2 = inlined_call_operand.<no memory space> [shape: f32[1,1], index: 2, kind: input, shape index: {}]
  %s3 = inlined_call_operand.hbm [shape: f32[1,256], index: 3, kind: output, shape index: {}]
  %s4 = sld [smem:[#allocation0]]
  $region45: #{tpu_custom_call.1} parent=0
    _
  %s6 = ssub.s32 1, %s4
  %s7 = scalar_select 0, %s6, %s4
  %v8 = vstv %s2
  %9 = vst [vmem:[#allocation2] sm:$0x1] %v8
  $region1: #{tpu_custom_call.1} parent=0
    #allocation3 [shape = 'u8[1024]{0}', space=vmem, size = 0x400, scoped, tag = 'output window, operand 0']
    #allocation4 [shape = 's32[2]{0}', space=sflag, size = 0x8, scoped, tag = 'scoped memory for tpu_custom_call.1']
    %10 = vsyncpa [#allocation4], 0
    %s11 = scalar_lea.sflag [#allocation4], 1
    %12 = vsyncpa %s11, 0
    loop: start=0, step=1, limit=4
    $region2: #{tpu_custom_call.1} parent=1 // loop_pre_header
      _
    $region3: #{tpu_custom_call.1} parent=1 // loop_header
      %s14 = sphi 0, %s18
      %p15 = scmp.ge.s32.totalorder %s14, 4
      %s24 = sphi 0, %s26
      %s27 = sphi 0, %s24
      %s28 = sphi 0, %s27
      %s44 = sphi 0, %s28
      %s48 = sphi 0, %s48
      %s50 = sphi 0, %s48
      %s51 = sphi 0, %s50
      %s65 = sphi 0, %s51
      %s69 = sphi 0, %s69
      %s71 = sphi 0, %s69
      %s72 = sphi 0, %s71
      %s86 = sphi 0, %s72
      %s92 = sphi 0, %s94
      %s95 = sphi 0, %s92
      %s96 = sphi 0, %s95
      %s112 = sphi 0, %s96
    $region4: #{tpu_custom_call.1} parent=1 // loop_header_branch
      %17 = sbr.rel (%p15) target = $region8
    $region5: #{tpu_custom_call.1} parent=1 // loop_body
      %s19 = ssub.s32 %s14, 1
      %s20 = ssub.s32 %s14, 2
      %s21 = sadd.s32 %s14, 1
      %s22 = ssub.s32 %s14, %s21
      %p23 = scmp.eq.s32.totalorder %s22, 0
      %s25 = sadd.s32 %s24, 1
      %s26 = scalar_select %p23, %s24, %s25
      %p29 = pneg %p23
      %p30 = scmp.eq.s32.totalorder %s14, 1
      %p31 = por %p29, %p30
      %p32 = scmp.ne.s32.totalorder %s24, %s27
      %p33 = scmp.eq.s32.totalorder %s14, 0
      %p34 = por %p32, %p33
      %p35 = scmp.ne.s32.totalorder %s24, %s27
      %p36 = scmp.eq.s32.totalorder %s19, 1
      %p37 = por %p35, %p36
      %p38 = scmp.ne.s32.totalorder %s27, %s28
      %p39 = scmp.eq.s32.totalorder %s19, 0
      %p40 = por %p38, %p39
      %p41 = scmp.ne.s32.totalorder %s27, %s28
      %p42 = scmp.eq.s32.totalorder %s20, 1
      %p43 = por %p41, %p42
      %p45 = scmp.ne.s32.totalorder %s28, %s44
      %p46 = scmp.eq.s32.totalorder %s20, 0
      %p47 = por %p45, %p46
      %s49 = sadd.s32 %s48, 1
      %p52 = scmp.eq.s32.totalorder %s14, 1
      %p53 = scmp.ne.s32.totalorder %s48, %s50
      %p54 = scmp.eq.s32.totalorder %s14, 0
      %p55 = por %p53, %p54
      %p56 = scmp.ne.s32.totalorder %s48, %s50
      %p57 = scmp.eq.s32.totalorder %s19, 1
      %p58 = por %p56, %p57
      %p59 = scmp.ne.s32.totalorder %s50, %s51
      %p60 = scmp.eq.s32.totalorder %s19, 0
      %p61 = por %p59, %p60
      %p62 = scmp.ne.s32.totalorder %s50, %s51
      %p63 = scmp.eq.s32.totalorder %s20, 1
      %p64 = por %p62, %p63
      %p66 = scmp.ne.s32.totalorder %s51, %s65
      %p67 = scmp.eq.s32.totalorder %s20, 0
      %p68 = por %p66, %p67
      %s70 = sadd.s32 %s69, 1
      %p73 = scmp.eq.s32.totalorder %s14, 1
      %p74 = scmp.ne.s32.totalorder %s69, %s71
      %p75 = scmp.eq.s32.totalorder %s14, 0
      %p76 = por %p74, %p75
      %p77 = scmp.ne.s32.totalorder %s69, %s71
      %p78 = scmp.eq.s32.totalorder %s19, 1
      %p79 = por %p77, %p78
      %p80 = scmp.ne.s32.totalorder %s71, %s72
      %p81 = scmp.eq.s32.totalorder %s19, 0
      %p82 = por %p80, %p81
      %p83 = scmp.ne.s32.totalorder %s71, %s72
      %p84 = scmp.eq.s32.totalorder %s20, 1
      %p85 = por %p83, %p84
      %p87 = scmp.ne.s32.totalorder %s72, %s86
      %p88 = scmp.eq.s32.totalorder %s20, 0
      %p89 = por %p87, %p88
      %s90 = ssub.s32 %s14, %s21
      %p91 = scmp.eq.s32.totalorder %s90, 0
      %s93 = sadd.s32 %s92, 1
      %s94 = scalar_select %p91, %s92, %s93
      %p97 = pneg %p91
      %p98 = scmp.eq.s32.totalorder %s14, 1
      %p99 = por %p97, %p98
      %p100 = scmp.ne.s32.totalorder %s92, %s95
      %p101 = scmp.eq.s32.totalorder %s14, 0
      %p102 = por %p100, %p101
      %p103 = scmp.ne.s32.totalorder %s92, %s95
      %p104 = scmp.eq.s32.totalorder %s19, 1
      %p105 = por %p103, %p104
      %p106 = scmp.ne.s32.totalorder %s95, %s96
      %p107 = scmp.eq.s32.totalorder %s19, 0
      %p108 = por %p106, %p107
      %p109 = scmp.ne.s32.totalorder %s95, %s96
      %p110 = scmp.eq.s32.totalorder %s20, 1
      %p111 = por %p109, %p110
      %p113 = scmp.ne.s32.totalorder %s96, %s112
      %p114 = scmp.eq.s32.totalorder %s20, 0
      %p115 = por %p113, %p114
      %p116 = scmp.le.s32.totalorder 1, %s14
      %p117 = scmp.lt.s32.totalorder %s14, 3
      %p118 = pnand %p116, %p117
      %p119 = pneg %p118
      // Predicated region
      $region9: #{tpu_custom_call.1} parent=5 // pred_check
        _
      $region10: #{tpu_custom_call.1} parent=5 // pred_check_branch
        %121 = sbr.rel (%p118) target = $region12
      $region11: #{tpu_custom_call.1} parent=5 // pred_region
        %s122 = ssub.s32 %s14, 1
        // Predicated region
        $region13: #{tpu_custom_call.1} parent=11 // pred_check
          %p123 = pneg %p61
        $region14: #{tpu_custom_call.1} parent=11 // pred_check_branch
          %125 = sbr.rel (%p123) target = $region16
        $region15: #{tpu_custom_call.1} parent=11 // pred_region
          _
        $region16: #{tpu_custom_call.1} parent=11 // pred_fallthru
          _
        // Predicated region
        $region17: #{tpu_custom_call.1} parent=11 // pred_check
          %p126 = pneg %p82
        $region18: #{tpu_custom_call.1} parent=11 // pred_check_branch
          %128 = sbr.rel (%p126) target = $region20
        $region19: #{tpu_custom_call.1} parent=11 // pred_region
          _
        $region20: #{tpu_custom_call.1} parent=11 // pred_fallthru
          _
      $region12: #{tpu_custom_call.1} parent=5 // pred_fallthru
        _
      %p129 = scmp.lt.s32.totalorder %s14, 2
      // Predicated region
      $region21: #{tpu_custom_call.1} parent=5 // pred_check
        %p130 = pneg %p129
      $region22: #{tpu_custom_call.1} parent=5 // pred_check_branch
        %132 = sbr.rel (%p130) target = $region24
      $region23: #{tpu_custom_call.1} parent=5 // pred_region
        // Predicated region
        $region25: #{tpu_custom_call.1} parent=23 // pred_check
          %p133 = pneg %p34
        $region26: #{tpu_custom_call.1} parent=23 // pred_check_branch
          %135 = sbr.rel (%p133) target = $region28
        $region27: #{tpu_custom_call.1} parent=23 // pred_region
          %s136 = smul.u32 16, %s14
          %p137 = scmp.lt.s32.totalorder %s136, 31
          %s138 = scalar_select %p137, %s136, 31
          %s139 = smul.addr %s138, 8
          %s140 = scalar_lea.vmem %s0, %s139
          %s141 = smul.u32 16, %s14
        $region28: #{tpu_custom_call.1} parent=23 // pred_fallthru
          _
      $region24: #{tpu_custom_call.1} parent=5 // pred_fallthru
        _
      %p142 = scmp.le.s32.totalorder 1, %s14
      %p143 = scmp.lt.s32.totalorder %s14, 3
      %p144 = pnand %p142, %p143
      %p145 = pneg %p144
      // Predicated region
      $region29: #{tpu_custom_call.1} parent=5 // pred_check
        _
      $region30: #{tpu_custom_call.1} parent=5 // pred_check_branch
        %147 = sbr.rel (%p144) target = $region32
      $region31: #{tpu_custom_call.1} parent=5 // pred_region
        %s148 = ssub.s32 %s14, 1
        %s149 = smul.u32 16, %s19
        %p150 = scmp.lt.s32.totalorder %s149, 31
        %s151 = scalar_select %p150, %s149, 31
        %s152 = smul.addr %s151, 8
        %s153 = scalar_lea.vmem %s0, %s152
        %p154 = pneg %p40
        %p155 = pneg %p37
        %p156 = pneg %p61
        %p157 = pneg %p58
        %p158 = pneg %p82
        %p159 = pneg %p79
        %p160 = pneg %p108
        %p161 = pneg %p105
        %s162 = sand.u32 %s95, 1
        %s163 = scalar_lea.sflag [#allocation4], %s162
        %s164 = sand.u32 %s95, 1
        %s165 = scalar_lea.vmem [#allocation3], %s164
        %s166 = smul.u32 16, %s19
        %p167 = scmp.lt.s32.totalorder %s166, 31
        %s168 = scalar_select %p167, %s166, 31
        %s169 = smul.addr %s168, 8
        %s170 = scalar_lea.vmem %s0, %s169
        %s171 = smul.u32 16, %s19
        %v172 = vld [vmem:[%s1] sm:$0xff]
        %v173 = vld [vmem:[%s170] sm:$0xff]
        %v174 = vld [vmem:[%s170 + $0x8] sm:$0xff]
        %v175 = vld [vmem:[%s170 + $0x10] sm:$0xff]
        %v176 = vld [vmem:[%s170 + $0x18] sm:$0xff]
        %v177 = vld [vmem:[%s170 + $0x20] sm:$0xff]
        %v178 = vld [vmem:[%s170 + $0x28] sm:$0xff]
        %v179 = vld [vmem:[%s170 + $0x30] sm:$0xff]
        %v180 = vld [vmem:[%s170 + $0x38] sm:$0xff]
        %v181 = vld [vmem:[%s170 + $0x40] sm:$0xff]
        %v182 = vld [vmem:[%s170 + $0x48] sm:$0xff]
        %v183 = vld [vmem:[%s170 + $0x50] sm:$0xff]
        %v184 = vld [vmem:[%s170 + $0x58] sm:$0xff]
        %v185 = vld [vmem:[%s170 + $0x60] sm:$0xff]
        %v186 = vld [vmem:[%s170 + $0x68] sm:$0xff]
        %v187 = vld [vmem:[%s170 + $0x70] sm:$0xff]
        %v188 = vld [vmem:[%s170 + $0x78] sm:$0xff]
        %vm189 = vcmask 261120
        %v191 = vsel %vm189, %v172, 0
        %v194 = vsel %vm189, %v173, 0
        %v197 = vsel %vm189, %v174, 0
        %v200 = vsel %vm189, %v175, 0
        %v203 = vsel %vm189, %v176, 0
        %v206 = vsel %vm189, %v177, 0
        %v209 = vsel %vm189, %v178, 0
        %v212 = vsel %vm189, %v179, 0
        %v215 = vsel %vm189, %v180, 0
        %v218 = vsel %vm189, %v181, 0
        %v221 = vsel %vm189, %v182, 0
        %v224 = vsel %vm189, %v183, 0
        %v227 = vsel %vm189, %v184, 0
        %v230 = vsel %vm189, %v185, 0
        %v233 = vsel %vm189, %v186, 0
        %v236 = vsel %vm189, %v187, 0
        %v239 = vsel %vm189, %v188, 0
        %241 = vmatprep.subr.mxu0 0.0
        %242 = vmatpush1.xpose.msra.mxu0 %v194
        %243 = vmatprep.subr.mxu0 0.0
        %244 = vmatpush1.xpose.msra.mxu0 %v197
        %245 = vmatprep.subr.mxu0 0.0
        %246 = vmatpush1.xpose.msra.mxu0 %v200
        %247 = vmatprep.subr.mxu0 0.0
        %248 = vmatpush1.xpose.msra.mxu0 %v203
        %249 = vmatprep.subr.mxu0 0.0
        %250 = vmatpush1.xpose.msra.mxu0 %v206
        %251 = vmatprep.subr.mxu0 0.0
        %252 = vmatpush1.xpose.msra.mxu0 %v209
        %253 = vmatprep.subr.mxu0 0.0
        %254 = vmatpush1.xpose.msra.mxu0 %v212
        %255 = vmatprep.subr.mxu0 0.0
        %256 = vmatpush1.xpose.msra.mxu0 %v215
        %257 = vmatprep.subr.mxu0 0.0
        %258 = vmatpush1.xpose.msra.mxu0 %v218
        %259 = vmatprep.subr.mxu0 0.0
        %260 = vmatpush1.xpose.msra.mxu0 %v221
        %261 = vmatprep.subr.mxu0 0.0
        %262 = vmatpush1.xpose.msra.mxu0 %v224
        %263 = vmatprep.subr.mxu0 0.0
        %264 = vmatpush1.xpose.msra.mxu0 %v227
        %265 = vmatprep.subr.mxu0 0.0
        %266 = vmatpush1.xpose.msra.mxu0 %v230
        %267 = vmatprep.subr.mxu0 0.0
        %268 = vmatpush1.xpose.msra.mxu0 %v233
        %269 = vmatprep.subr.mxu0 0.0
        %270 = vmatpush1.xpose.msra.mxu0 %v236
        %271 = vmatprep.subr.mxu0 0.0
        %272 = vmatpush1.xpose.msra.mxu0 %v239
        %273 = vmatprep.subr.mxu0 0.0
        %274 = vmatpush1.xpose.msra.mxu0 0.0
        %275 = vmatprep.subr.mxu0 0.0
        %276 = vmatpush1.xpose.msra.mxu0 0.0
        %277 = vmatprep.subr.mxu0 0.0
        %278 = vmatpush1.xpose.msra.mxu0 0.0
        %279 = vmatprep.subr.mxu0 0.0
        %280 = vmatpush1.xpose.msra.mxu0 0.0
        %281 = vmatprep.subr.mxu0 0.0
        %282 = vmatpush1.xpose.msra.mxu0 0.0
        %283 = vmatprep.subr.mxu0 0.0
        %284 = vmatpush1.xpose.msra.mxu0 0.0
        %285 = vmatprep.subr.mxu0 0.0
        %286 = vmatpush1.xpose.msra.mxu0 0.0
        %287 = vmatprep.subr.mxu0 0.0
        %288 = vmatpush1.xpose.msra.mxu0 0.0
        %289 = vmatprep.subr.mxu0 0.0
        %290 = vmatpush1.xpose.msra.mxu0 0.0
        %291 = vmatprep.subr.mxu0 0.0
        %292 = vmatpush1.xpose.msra.mxu0 0.0
        %293 = vmatprep.subr.mxu0 0.0
        %294 = vmatpush1.xpose.msra.mxu0 0.0
        %295 = vmatprep.subr.mxu0 0.0
        %296 = vmatpush1.xpose.msra.mxu0 0.0
        %297 = vmatprep.subr.mxu0 0.0
        %298 = vmatpush1.xpose.msra.mxu0 0.0
        %299 = vmatprep.subr.mxu0 0.0
        %300 = vmatpush1.xpose.msra.mxu0 0.0
        %301 = vmatprep.subr.mxu0 0.0
        %302 = vmatpush1.xpose.msra.mxu0 0.0
        %303 = vmatprep.subr.mxu0 0.0
        %304 = vmatpush1.xpose.msra.mxu0 0.0
        %305 = vmatprep.mubr.f32.mxu0 0.0
        %306 = vmatmul.mubr.f32.gmra.mrb[0].mxu0 %v191
        %v307 = vpop.f32.mrb[0].mxu0
        %v308 = vadd.f32 0.0, %v307
        %v309 = vpop.f32.mrb[0].mxu0
        %310 = vdwg.mxu0
        %v311 = vld [vmem:[#allocation2] sm:$0x1]
        %313 = vset.pattern.permute.xlu0 0
        %314 = vperm.xlu0 %313, %v311
        %v315 = vpop.permute.xlu0 %314
        %v317 = vlaneseq
        %v318 = vshrl.u32 %v317, 7
        %v319 = vsub.s32 0, %v318
        %v320 = vrot.slane %v315, %v319
        %v321 = vadd.f32 %v308, %v320
        %v322 = vxor.u32 %v321, 2147483648
        %v323 = vmul.f32 %v322, 1.442695
        %v324 = vpow.pop %v323
        %v325 = vadd.f32 %v324, 1.0
        %v326 = vrcp.pop %v325
        %v327 = vmul.f32 1.0, %v326
        %328 = vst [vmem:[%s165] sm:$0x1] %v327
        %s329 = sand.u32 %s95, 1
        %s330 = scalar_lea.sflag [#allocation4], %s329
        %s331 = sand.u32 %s95, 1
        %s332 = scalar_lea.vmem [#allocation3], %s331
        // Predicated region
        $region33: #{tpu_custom_call.1} parent=31 // pred_check
          %p333 = pneg %p105
        $region34: #{tpu_custom_call.1} parent=31 // pred_check_branch
          %335 = sbr.rel (%p333) target = $region36
        $region35: #{tpu_custom_call.1} parent=31 // pred_region
          %s337 = ssub.s32 16, 16
          %338 = vsyncadd %s330, %s337
          %s339 = smul.addr %s19, 16
          %s340 = scalar_lea.hbm %s3, %s339
          %s342 = sshll.u32 %s332, 4
          %s343 = int_to_ptr.vmem [resolvable:$true] %s342
          %345 = dma.vmem_to_hbm [thread:$0]  %s343, 16, %s340, %s330
        $region36: #{tpu_custom_call.1} parent=31 // pred_fallthru
          _
      $region32: #{tpu_custom_call.1} parent=5 // pred_fallthru
        _
      %p346 = scmp.le.s32.totalorder 2, %s14
      // Predicated region
      $region37: #{tpu_custom_call.1} parent=5 // pred_check
        %p347 = pneg %p346
      $region38: #{tpu_custom_call.1} parent=5 // pred_check_branch
        %349 = sbr.rel (%p347) target = $region40
      $region39: #{tpu_custom_call.1} parent=5 // pred_region
        %s350 = ssub.s32 %s14, 2
        // Predicated region
        $region41: #{tpu_custom_call.1} parent=39 // pred_check
          %p351 = pneg %p111
        $region42: #{tpu_custom_call.1} parent=39 // pred_check_branch
          %353 = sbr.rel (%p351) target = $region44
        $region43: #{tpu_custom_call.1} parent=39 // pred_region
          %s354 = sand.u32 %s96, 1
          %s355 = scalar_lea.sflag [#allocation4], %s354
          %s356 = sand.u32 %s96, 1
          %s357 = scalar_lea.vmem [#allocation3], %s356
          %358 = dma.done %s355, 16
        $region44: #{tpu_custom_call.1} parent=39 // pred_fallthru
          _
      $region40: #{tpu_custom_call.1} parent=5 // pred_fallthru
        _
    $region6: #{tpu_custom_call.1} parent=1 // loop_footer
      %s18 = sadd.s32 1, %s14
    $region7: #{tpu_custom_call.1} parent=1 // loop_footer_branch
      %13 = sbr.rel target = $region3
    $region8: #{tpu_custom_call.1} parent=1 // loop_exit
      _
    %359 = vsyncpa [#allocation4], 1
    %s360 = scalar_lea.sflag [#allocation4], 1
    %361 = vsyncpa %s360, 1

</llo_original>
